<compile_context>
chip_gen: v5e
topology: v5e:2x2
jax: 0.10.0
libtpu: 0.0.40
codegen_flags: <defaults>
</compile_context>

<pallas_src>
import functools

import jax
import jax.numpy as jnp
import numpy as np
from jax.experimental import pallas as pl
from jax.experimental.pallas import tpu as pltpu


def _round_up(a, b):
    return (a + b - 1) // b * b


def _cdiv(a, b):
    return -(-a // b)


# ---------------------------------------------------------------------------
# Kernel: one (TM, Kblk) @ (Kblk, O) MXU matmul per grid step; f32 accumulator
# carried across the (optional) K-split axis.  Grid = (M strips, K blocks).
# ---------------------------------------------------------------------------
def _im2col_matmul_kernel(a_ref, w_ref, o_ref, acc_ref):
    @pl.when(pl.program_id(1) == 0)
    def _init():
        acc_ref[...] = jnp.zeros_like(acc_ref)

    acc_ref[...] += jnp.dot(a_ref[...], w_ref[...],
                            preferred_element_type=jnp.float32)

    @pl.when(pl.program_id(1) == pl.num_programs(1) - 1)
    def _finalize():
        o_ref[...] = acc_ref[...].astype(o_ref.dtype)


def _choose_tiles(M, Kdim, O, in_item, out_item, force_k_block=None):
    """Pick (TM, Mp, grid_m, Kblk, Kp, grid_k) under a conservative VMEM budget."""
    # Packed-sublane row multiple: 8 (f32) / 16 (bf16) / 32 (int8/fp8).
    row_mult = {4: 8, 2: 16, 1: 32}.get(in_item, 8)
    BUDGET = 20 * 1024 * 1024    # pipeline-buffer budget; fits v5e/v6e/v7x VMEM
    TM_CAP = 2048

    def tm_for(kblk):
        # double-buffered a & w blocks + double-buffered out block + f32 acc
        fixed = 2 * kblk * O * in_item
        per_row = 2 * kblk * in_item + 2 * O * out_item + O * 4
        tm = (BUDGET - fixed) // per_row
        return max(row_mult, min(TM_CAP, (tm // row_mult) * row_mult))

    if force_k_block is not None:
        kblk = int(force_k_block)
        assert kblk % 128 == 0, "forced K block must be a multiple of 128"
    elif Kdim <= 512 or tm_for(Kdim) >= min(256, _round_up(M, row_mult)):
        kblk = Kdim                      # whole contraction resident: 1 K step
    else:
        # Split the contraction.  Deepest block that is a multiple of 256
        # (fills the 256-deep MXU on v6e/v7x; two passes on v5e's 128-deep MXU)
        # while still allowing a >=256-row strip in the budget.
        kblk = 256
        while kblk + 256 < Kdim and tm_for(kblk + 256) >= 256:
            kblk += 256

    if kblk >= Kdim:
        kblk, Kp = Kdim, Kdim            # full-extent last dim: no zero-padding
    else:
        Kp = _round_up(Kdim, kblk)
    grid_k = Kp // kblk

    tm = tm_for(kblk)
    grid_m = max(1, _cdiv(M, tm))
    if M > row_mult:
        grid_m = max(grid_m, 2)          # give both v7x TensorCores work
    if grid_m > 1 and grid_m % 2:
        grid_m += 1                      # balanced (even) strip count for 2 TCs
    TM = _round_up(_cdiv(M, grid_m), row_mult)
    Mp = TM * grid_m
    return TM, Mp, grid_m, kblk, Kp, grid_k


def _smooth_weight(weight_oikk):
    """Mirror of the torch forward's weight smoothing (done in input precision)."""
    wp = jnp.pad(weight_oikk, ((0, 0), (0, 0), (1, 1), (1, 1)))
    return (wp[:, :, 1:, 1:] + wp[:, :, :-1, 1:]
            + wp[:, :, 1:, :-1] + wp[:, :, :-1, :-1]) * 0.25


@functools.partial(jax.jit, static_argnames=("compute_dtype", "_force_k_block"))
def smooth_downsample(x_nchw, weight_oikk, *, compute_dtype=jnp.bfloat16,
                      _force_k_block=None):
    """SmoothDownsample.forward.  The module's `bias` is never applied in the
    torch forward(), so it is intentionally not applied here either.

    compute_dtype: dtype of the matmul *operands* (accumulation is always f32).
    bf16 (default) halves HBM traffic on this HBM-bound op; pass jnp.float32
    (or None to follow the input dtype) for bit-strict behaviour.
    """
    O, I, K, K2 = weight_oikk.shape
    assert K == K2
    N, C, H, W = x_nchw.shape
    assert C == I
    padding = (K - 1) // 2
    keff = K + 1
    out_dtype = x_nchw.dtype
    cdt = jnp.dtype(out_dtype if compute_dtype is None else compute_dtype)

    # ---- weight smoothing + flatten ----
    w_s = _smooth_weight(weight_oikk)                   # (O, I, keff, keff)
    w_hwio = jnp.transpose(w_s, (2, 3, 1, 0))           # (kh, kw, ci, o)

    OH = (H + 2 * padding - keff) // 2 + 1
    OW = (W + 2 * padding - keff) // 2 + 1
    M = N * OH * OW
    Kdim = keff * keff * I

    # Cast activations to the compute dtype FIRST so every boundary pass
    # (transpose / pad / gather / concat) moves half the bytes when bf16.
    x = jnp.transpose(x_nchw.astype(cdt), (0, 2, 3, 1))           # NHWC

    if keff % 2 == 0:
        # Space-to-depth by 2x2: the stride-2 keff x keff conv becomes a
        # stride-1 (keff/2 x keff/2) conv over 4*I channels -> only (keff/2)^2
        # contiguous taps instead of keff^2 stride-2 strided gathers.
        th_n = keff // 2
        eh = (H + 2 * padding) % 2
        ew = (W + 2 * padding) % 2
        x = jnp.pad(x, ((0, 0), (padding, padding + eh),
                        (padding, padding + ew), (0, 0)))
        Hs = (H + 2 * padding + eh) // 2
        Ws = (W + 2 * padding + ew) // 2
        x = x.reshape(N, Hs, 2, Ws, 2, I)
        x = jnp.transpose(x, (0, 1, 3, 2, 4, 5)).reshape(N, Hs, Ws, 4 * I)
        taps = [x[:, th:th + OH, tw:tw + OW, :]
                for th in range(th_n) for tw in range(th_n)]
        # Reorder weight rows to the tap column order (th, tw, dy, dx, ci).
        w_mat = jnp.transpose(
            w_hwio.reshape(th_n, 2, th_n, 2, I, O), (0, 2, 1, 3, 4, 5)
        ).reshape(Kdim, O)
    else:
        # Generic path (even kernel_size): keff^2 stride-2 taps, (kh, kw, ci).
        x = jnp.pad(x, ((0, 0), (padding, padding), (padding, padding), (0, 0)))
        taps = [x[:, kh:kh + 2 * OH:2, kw:kw + 2 * OW:2, :]
                for kh in range(keff) for kw in range(keff)]
        w_mat = w_hwio.reshape(Kdim, O)

    a = jnp.concatenate(taps, axis=-1).reshape(M, Kdim)
    w_mat = w_mat.astype(cdt)

    in_item = cdt.itemsize
    out_item = jnp.dtype(out_dtype).itemsize
    TM, Mp, grid_m, Kblk, Kp, grid_k = _choose_tiles(
        M, Kdim, O, in_item, out_item, _force_k_block)

    if Mp != M or Kp != Kdim:
        a = jnp.pad(a, ((0, Mp - M), (0, Kp - Kdim)))
    if Kp != Kdim:
        w_mat = jnp.pad(w_mat, ((0, Kp - Kdim), (0, 0)))

    cost = pl.CostEstimate(
        flops=2 * Mp * Kp * O,
        transcendentals=0,
        # `a` streamed once, weight resident (counted once), output written once
        bytes_accessed=Mp * Kp * in_item + Kp * O * in_item + Mp * O * out_item,
    )

    # TODO(synk): for very large images, move the tap gather into the kernel
    # (keep padded NHWC x in HBM via memory_space=pl.ANY, DMA a halo row-strip
    # per grid step and build the im2col block in VMEM scratch) to remove the
    # ~4x wrapper-side im2col expansion of the dominant HBM read stream.
    out_pad = pl.pallas_call(
        _im2col_matmul_kernel,
        out_shape=jax.ShapeDtypeStruct((Mp, O), out_dtype),
        grid_spec=pltpu.PrefetchScalarGridSpec(
            num_scalar_prefetch=0,
            grid=(grid_m, grid_k),
            in_specs=[
                pl.BlockSpec((TM, Kblk), lambda i, k: (i, k)),
                pl.BlockSpec((Kblk, O), lambda i, k: (k, 0)),
            ],
            out_specs=pl.BlockSpec((TM, O), lambda i, k: (i, 0)),
            scratch_shapes=[pltpu.VMEM((TM, O), jnp.float32)],
        ),
        compiler_params=pltpu.CompilerParams(
            dimension_semantics=("parallel", "arbitrary"),
            vmem_limit_bytes=32 * 1024 * 1024,   # >= default on every gen; tiles
        ),                                       # sized to ~20 MiB above
        cost_estimate=cost,
    )(a, w_mat)

    out = out_pad[:M, :].reshape(N, OH, OW, O)
    return jnp.transpose(out, (0, 3, 1, 2))      # back to NCHW


def _reference(x_nchw, weight_oikk):
    """Pure-JAX reference of the PyTorch forward (for correctness check)."""
    K = weight_oikk.shape[-1]
    padding = (K - 1) // 2
    w_smooth = _smooth_weight(weight_oikk)
    return jax.lax.conv_general_dilated(
        x_nchw, w_smooth, window_strides=(2, 2),
        padding=[(padding, padding), (padding, padding)],
        dimension_numbers=("NCHW", "OIHW", "NCHW"),
    )


if __name__ == "__main__":
    # Module config: in_channels=4, out_channels=8, kernel_size=3, bias=True
    in_channels, out_channels, kernel_size = 4, 8, 3
    N, H, W = 2, 16, 16

    key = jax.random.PRNGKey(0)
    kx, kw, kx2, kw2 = jax.random.split(key, 4)
    x = jax.random.normal(kx, (N, in_channels, H, W), dtype=jnp.float32)
    weight = jax.random.normal(
        kw, (out_channels, in_channels, kernel_size, kernel_size), dtype=jnp.float32)
    # Declared in the torch __init__ but never used in forward(); kept here only
    # to document that it is intentionally not applied.
    bias = jnp.zeros((out_channels,), dtype=jnp.float32)

    ref = jax.block_until_ready(_reference(x, weight))

    # 1) Default path: bf16 operands, f32 accumulation (looser tolerance).
    out_bf16 = jax.block_until_ready(smooth_downsample(x, weight))
    assert out_bf16.shape == (N, out_channels, H // 2, W // 2)
    np.testing.assert_allclose(np.asarray(out_bf16), np.asarray(ref),
                               rtol=2e-2, atol=5e-2)

    # 2) Strict f32-operand path.
    out_f32 = jax.block_until_ready(
        smooth_downsample(x, weight, compute_dtype=jnp.float32))
    np.testing.assert_allclose(np.asarray(out_f32), np.asarray(ref),
                               rtol=1e-4, atol=1e-4)

    # 3) Exercise the K-split accumulator path (larger Cin, forced 128-deep K block).
    x2 = jax.random.normal(kx2, (2, 16, 16, 16), dtype=jnp.float32)
    w2 = jax.random.normal(kw2, (8, 16, 3, 3), dtype=jnp.float32)
    out_ks = jax.block_until_ready(
        smooth_downsample(x2, w2, compute_dtype=jnp.float32, _force_k_block=128))
    np.testing.assert_allclose(np.asarray(out_ks), np.asarray(_reference(x2, w2)),
                               rtol=1e-4, atol=1e-4)

    print("KERNEL_OK")
</pallas_src>

<mosaic_0001>
module attributes {stable_mosaic.version = 11 : i64} {
  func.func @_im2col_matmul_kernel(%arg0: i32, %arg1: i32, %arg2: memref<64x64xbf16, #tpu.memory_space<vmem>>, %arg3: memref<64x8xbf16, #tpu.memory_space<vmem>>, %arg4: memref<64x8xf32, #tpu.memory_space<vmem>>, %arg5: memref<64x8xf32, #tpu.memory_space<vmem>>) attributes {dimension_semantics = [#tpu.dimension_semantics<parallel>, #tpu.dimension_semantics<arbitrary>], iteration_bounds = array<i64: 2, 1>, scalar_prefetch = 0 : i64, scratch_operands = 1 : i64, tpu.core_type = #tpu.core_type<tc>, window_params = [{transform_indices = @transform_0, window_bounds = array<i64: 64, 64>}, {transform_indices = @transform_1, window_bounds = array<i64: 64, 8>}, {transform_indices = @transform_2, window_bounds = array<i64: 64, 8>}]} {
    %c0_i32 = arith.constant 0 : i32
    %0 = arith.cmpi eq, %arg1, %c0_i32 : i32
    %1 = arith.extui %0 : i1 to i32
    %c0_i32_0 = arith.constant 0 : i32
    %2 = arith.cmpi ne, %1, %c0_i32_0 : i32
    scf.if %2 {
      %cst_10 = arith.constant 0.000000e+00 : f32
      %12 = vector.broadcast %cst_10 : f32 to vector<64x8xf32>
      %c0_11 = arith.constant 0 : index
      %c0_12 = arith.constant 0 : index
      %13 = vector.load %arg5[%c0_11, %c0_12] : memref<64x8xf32, #tpu.memory_space<vmem>>, vector<64x8xf32>
      tpu.vector_store %arg5[%c0_11, %c0_12], %12 {strides = array<i32>} : memref<64x8xf32, #tpu.memory_space<vmem>>, vector<64x8xf32>,
    } else {
    }
    %c0 = arith.constant 0 : index
    %c0_1 = arith.constant 0 : index
    %3 = vector.load %arg5[%c0, %c0_1] : memref<64x8xf32, #tpu.memory_space<vmem>>, vector<64x8xf32>
    %c0_2 = arith.constant 0 : index
    %c0_3 = arith.constant 0 : index
    %4 = vector.load %arg2[%c0_2, %c0_3] : memref<64x64xbf16, #tpu.memory_space<vmem>>, vector<64x64xbf16>
    %c0_4 = arith.constant 0 : index
    %c0_5 = arith.constant 0 : index
    %5 = vector.load %arg3[%c0_4, %c0_5] : memref<64x8xbf16, #tpu.memory_space<vmem>>, vector<64x8xbf16>
    %cst = arith.constant dense<0.000000e+00> : vector<64x8xf32>
    %6 = tpu.matmul %4, %5, %cst {dimension_numbers = #tpu.dot_dimension_numbers<[1], [0], [0], [1], [0, 0, 1, 1], [], []>} : vector<64x64xbf16>, vector<64x8xbf16>, vector<64x8xf32> -> vector<64x8xf32>
    %7 = arith.addf %3, %6 : vector<64x8xf32>
    %c0_6 = arith.constant 0 : index
    %c0_7 = arith.constant 0 : index
    %8 = vector.load %arg5[%c0_6, %c0_7] : memref<64x8xf32, #tpu.memory_space<vmem>>, vector<64x8xf32>
    tpu.vector_store %arg5[%c0_6, %c0_7], %7 {strides = array<i32>} : memref<64x8xf32, #tpu.memory_space<vmem>>, vector<64x8xf32>,
    %c0_i32_8 = arith.constant 0 : i32
    %9 = arith.cmpi eq, %arg1, %c0_i32_8 : i32
    %10 = arith.extui %9 : i1 to i32
    %c0_i32_9 = arith.constant 0 : i32
    %11 = arith.cmpi ne, %10, %c0_i32_9 : i32
    scf.if %11 {
      %c0_10 = arith.constant 0 : index
      %c0_11 = arith.constant 0 : index
      %12 = vector.load %arg5[%c0_10, %c0_11] : memref<64x8xf32, #tpu.memory_space<vmem>>, vector<64x8xf32>
      %c0_12 = arith.constant 0 : index
      %c0_13 = arith.constant 0 : index
      %13 = vector.load %arg4[%c0_12, %c0_13] : memref<64x8xf32, #tpu.memory_space<vmem>>, vector<64x8xf32>
      tpu.vector_store %arg4[%c0_12, %c0_13], %12 {strides = array<i32>} : memref<64x8xf32, #tpu.memory_space<vmem>>, vector<64x8xf32>,
    } else {
    }
    return
  }
  func.func @transform_0(%arg0: i32, %arg1: i32) -> (i32, i32) {
    %c0_i32 = arith.constant 0 : i32
    return %arg0, %arg1 : i32, i32
  }
  func.func @transform_1(%arg0: i32, %arg1: i32) -> (i32, i32) {
    %c0_i32 = arith.constant 0 : i32
    %c0_i32_0 = arith.constant 0 : i32
    return %arg1, %c0_i32 : i32, i32
  }
  func.func @transform_2(%arg0: i32, %arg1: i32) -> (i32, i32) {
    %c0_i32 = arith.constant 0 : i32
    %c0_i32_0 = arith.constant 0 : i32
    return %arg0, %c0_i32 : i32, i32
  }
}

</mosaic_0001>

<llo_original>
// kernel: smooth_downsample.1
$region0: #{smooth_downsample.1}
  #allocation0 [shape = 'u32[]', space=smem, size = 0x4, offset = 0x4, fixed_abs, tag = 'smem constant byte address 0x4 - core index']
  #allocation1 [shape = 'u32[72,128]{1,0:T(1,128)}', space=vmem, size = 0x9000, scoped, tag = 'internal scratch']
  #allocation2 [shape = 'f32[64,8]{1,0:T(8,128)}', space=vmem, size = 0x8000, scoped, tag = 'scratch operand']
  %s0 = inlined_call_operand.vmem [shape: bf16[128,64], index: 0, kind: input, shape index: {}]
  %s1 = inlined_call_operand.vmem [shape: bf16[64,8], index: 1, kind: input, shape index: {}]
  %s2 = inlined_call_operand.vmem [shape: f32[128,8], index: 2, kind: output, shape index: {}]
  %s3 = sld [smem:[#allocation0]]
  $region49: #{smooth_downsample.1} parent=0
    _
  %s5 = ssub.s32 1, %s3
  %s6 = scalar_select 0, %s5, %s3
  loop: start=0, step=1, limit=4
  $region2: #{smooth_downsample.1} parent=0 // loop_pre_header
    _
  $region3: #{smooth_downsample.1} parent=0 // loop_header
    %s8 = sphi 0, %s12
    %p9 = scmp.ge.s32.totalorder %s8, 4
    %s15 = sphi 0, %s27
    %s16 = sphi 0, %s23
    %s17 = sphi 0, %s15
    %s18 = sphi 0, %s16
    %s19 = sphi 0, %s17
    %s20 = sphi 0, %s18
    %s32 = sphi 0, %s34
    %s35 = sphi 0, %s32
    %s36 = sphi 0, %s35
    %s52 = sphi 0, %s36
    %s58 = sphi 0, %s60
    %s61 = sphi 0, %s58
    %s62 = sphi 0, %s61
    %s78 = sphi 0, %s62
    %s84 = sphi 0, %s86
    %s87 = sphi 0, %s84
    %s88 = sphi 0, %s87
    %s104 = sphi 0, %s88
  $region4: #{smooth_downsample.1} parent=0 // loop_header_branch
    %11 = sbr.rel (%p9) target = $region8
  $region5: #{smooth_downsample.1} parent=0 // loop_body
    %s13 = ssub.s32 %s8, 1
    %s14 = ssub.s32 %s8, 2
    %s21 = sadd.s32 1, %s16
    %p22 = scmp.ge.s32.totalorder %s21, 1
    %s23 = scalar_select %p22, 0, %s21
    %s24 = sadd.s32 1, %s15
    %s25 = scalar_select %p22, %s24, %s15
    %p26 = scmp.ge.s32.totalorder %s25, 2
    %s27 = scalar_select %p26, 0, %s25
    %s28 = ssub.s32 %s15, %s27
    %s29 = ssub.s32 %s16, %s23
    %s30 = sor.u32 %s28, %s29
    %p31 = scmp.eq.s32.totalorder %s30, 0
    %s33 = sadd.s32 %s32, 1
    %s34 = scalar_select %p31, %s32, %s33
    %p37 = pneg %p31
    %p38 = scmp.eq.s32.totalorder %s8, 1
    %p39 = por %p37, %p38
    %p40 = scmp.ne.s32.totalorder %s32, %s35
    %p41 = scmp.eq.s32.totalorder %s8, 0
    %p42 = por %p40, %p41
    %p43 = scmp.ne.s32.totalorder %s32, %s35
    %p44 = scmp.eq.s32.totalorder %s13, 1
    %p45 = por %p43, %p44
    %p46 = scmp.ne.s32.totalorder %s35, %s36
    %p47 = scmp.eq.s32.totalorder %s13, 0
    %p48 = por %p46, %p47
    %p49 = scmp.ne.s32.totalorder %s35, %s36
    %p50 = scmp.eq.s32.totalorder %s14, 1
    %p51 = por %p49, %p50
    %p53 = scmp.ne.s32.totalorder %s36, %s52
    %p54 = scmp.eq.s32.totalorder %s14, 0
    %p55 = por %p53, %p54
    %s56 = ssub.s32 %s16, %s23
    %p57 = scmp.eq.s32.totalorder %s56, 0
    %s59 = sadd.s32 %s58, 1
    %s60 = scalar_select %p57, %s58, %s59
    %p63 = pneg %p57
    %p64 = scmp.eq.s32.totalorder %s8, 1
    %p65 = por %p63, %p64
    %p66 = scmp.ne.s32.totalorder %s58, %s61
    %p67 = scmp.eq.s32.totalorder %s8, 0
    %p68 = por %p66, %p67
    %p69 = scmp.ne.s32.totalorder %s58, %s61
    %p70 = scmp.eq.s32.totalorder %s13, 1
    %p71 = por %p69, %p70
    %p72 = scmp.ne.s32.totalorder %s61, %s62
    %p73 = scmp.eq.s32.totalorder %s13, 0
    %p74 = por %p72, %p73
    %p75 = scmp.ne.s32.totalorder %s61, %s62
    %p76 = scmp.eq.s32.totalorder %s14, 1
    %p77 = por %p75, %p76
    %p79 = scmp.ne.s32.totalorder %s62, %s78
    %p80 = scmp.eq.s32.totalorder %s14, 0
    %p81 = por %p79, %p80
    %s82 = ssub.s32 %s15, %s27
    %p83 = scmp.eq.s32.totalorder %s82, 0
    %s85 = sadd.s32 %s84, 1
    %s86 = scalar_select %p83, %s84, %s85
    %p89 = pneg %p83
    %p90 = scmp.eq.s32.totalorder %s8, 1
    %p91 = por %p89, %p90
    %p92 = scmp.ne.s32.totalorder %s84, %s87
    %p93 = scmp.eq.s32.totalorder %s8, 0
    %p94 = por %p92, %p93
    %p95 = scmp.ne.s32.totalorder %s84, %s87
    %p96 = scmp.eq.s32.totalorder %s13, 1
    %p97 = por %p95, %p96
    %p98 = scmp.ne.s32.totalorder %s87, %s88
    %p99 = scmp.eq.s32.totalorder %s13, 0
    %p100 = por %p98, %p99
    %p101 = scmp.ne.s32.totalorder %s87, %s88
    %p102 = scmp.eq.s32.totalorder %s14, 1
    %p103 = por %p101, %p102
    %p105 = scmp.ne.s32.totalorder %s88, %s104
    %p106 = scmp.eq.s32.totalorder %s14, 0
    %p107 = por %p105, %p106
    %p108 = scmp.le.s32.totalorder 1, %s8
    %p109 = scmp.lt.s32.totalorder %s8, 3
    %p110 = pnand %p108, %p109
    %p111 = pneg %p110
    // Predicated region
    $region9: #{smooth_downsample.1} parent=5 // pred_check
      _
    $region10: #{smooth_downsample.1} parent=5 // pred_check_branch
      %113 = sbr.rel (%p110) target = $region12
    $region11: #{smooth_downsample.1} parent=5 // pred_region
      %s114 = ssub.s32 %s8, 1
      // Predicated region
      $region13: #{smooth_downsample.1} parent=11 // pred_check
        %p115 = pneg %p74
      $region14: #{smooth_downsample.1} parent=11 // pred_check_branch
        %117 = sbr.rel (%p115) target = $region16
      $region15: #{smooth_downsample.1} parent=11 // pred_region
        %s118 = smul.u32 8, %s18
        %p119 = scmp.lt.s32.totalorder %s118, 7
        %s120 = scalar_select %p119, %s118, 7
        %s121 = smul.addr %s120, 4
        %s122 = scalar_lea.vmem %s1, %s121
        %s123 = smul.u32 8, %s18
      $region16: #{smooth_downsample.1} parent=11 // pred_fallthru
        _
    $region12: #{smooth_downsample.1} parent=5 // pred_fallthru
      _
    %p124 = scmp.lt.s32.totalorder %s8, 2
    // Predicated region
    $region17: #{smooth_downsample.1} parent=5 // pred_check
      %p125 = pneg %p124
    $region18: #{smooth_downsample.1} parent=5 // pred_check_branch
      %127 = sbr.rel (%p125) target = $region20
    $region19: #{smooth_downsample.1} parent=5 // pred_region
      // Predicated region
      $region21: #{smooth_downsample.1} parent=19 // pred_check
        %p128 = pneg %p42
      $region22: #{smooth_downsample.1} parent=19 // pred_check_branch
        %130 = sbr.rel (%p128) target = $region24
      $region23: #{smooth_downsample.1} parent=19 // pred_region
        %s131 = smul.u32 8, %s15
        %p132 = scmp.lt.s32.totalorder %s131, 15
        %s133 = scalar_select %p132, %s131, 15
        %p134 = scmp.lt.s32.totalorder %s16, 0
        %s135 = scalar_select %p134, %s16, 0
        %s136 = sadd.s32 %s135, %s133
        %s137 = smul.addr %s136, 4
        %s138 = scalar_lea.vmem %s0, %s137
        %s139 = smul.u32 8, %s15
      $region24: #{smooth_downsample.1} parent=19 // pred_fallthru
        _
    $region20: #{smooth_downsample.1} parent=5 // pred_fallthru
      _
    %p140 = scmp.le.s32.totalorder 1, %s8
    %p141 = scmp.lt.s32.totalorder %s8, 3
    %p142 = pnand %p140, %p141
    %p143 = pneg %p142
    // Predicated region
    $region25: #{smooth_downsample.1} parent=5 // pred_check
      _
    $region26: #{smooth_downsample.1} parent=5 // pred_check_branch
      %145 = sbr.rel (%p142) target = $region28
    $region27: #{smooth_downsample.1} parent=5 // pred_region
      %s146 = ssub.s32 %s8, 1
      %s147 = smul.u32 8, %s17
      %p148 = scmp.lt.s32.totalorder %s147, 15
      %s149 = scalar_select %p148, %s147, 15
      %p150 = scmp.lt.s32.totalorder %s18, 0
      %s151 = scalar_select %p150, %s18, 0
      %s152 = sadd.s32 %s151, %s149
      %s153 = smul.addr %s152, 4
      %s154 = scalar_lea.vmem %s0, %s153
      %p155 = pneg %p48
      %p156 = pneg %p45
      %s157 = smul.u32 8, %s18
      %p158 = scmp.lt.s32.totalorder %s157, 7
      %s159 = scalar_select %p158, %s157, 7
      %s160 = smul.addr %s159, 4
      %s161 = scalar_lea.vmem %s1, %s160
      %p162 = pneg %p74
      %p163 = pneg %p71
      %p164 = pneg %p100
      %p165 = pneg %p97
      %s166 = smul.u32 8, %s17
      %p167 = scmp.lt.s32.totalorder %s166, 15
      %s168 = scalar_select %p167, %s166, 15
      %s169 = smul.addr %s168, 8
      %s170 = scalar_lea.vmem %s2, %s169
      %s171 = smul.u32 8, %s17
      %p172 = scmp.lt.s32.totalorder %s171, 15
      %s173 = scalar_select %p172, %s171, 15
      %p174 = scmp.lt.s32.totalorder %s18, 0
      %s175 = scalar_select %p174, %s18, 0
      %s176 = sadd.s32 %s175, %s173
      %s177 = smul.addr %s176, 4
      %s178 = scalar_lea.vmem %s0, %s177
      %s179 = smul.u32 8, %s17
      %s180 = smul.u32 8, %s18
      %p181 = scmp.lt.s32.totalorder %s180, 7
      %s182 = scalar_select %p181, %s180, 7
      %s183 = smul.addr %s182, 4
      %s184 = scalar_lea.vmem %s1, %s183
      %s185 = smul.u32 8, %s18
      %s186 = smul.u32 8, %s17
      %p187 = scmp.lt.s32.totalorder %s186, 15
      %s188 = scalar_select %p187, %s186, 15
      %s189 = smul.addr %s188, 8
      %s190 = scalar_lea.vmem %s2, %s189
      %s191 = smul.u32 8, %s17
      %p193 = scmp.eq.s32.totalorder %s18, 0
      // Predicated region
      $region29: #{smooth_downsample.1} parent=27 // pred_check
        %p194 = pneg %p193
      $region30: #{smooth_downsample.1} parent=27 // pred_check_branch
        %196 = sbr.rel (%p194) target = $region32
      $region31: #{smooth_downsample.1} parent=27 // pred_region
        %vm197 = vcmask 64512
        %198 = vst.msk [vmem:[#allocation2] sm:$0xff] %vm197, 0.0
        %199 = vst.msk [vmem:[#allocation2 + $0x8] sm:$0xff] %vm197, 0.0
        %200 = vst.msk [vmem:[#allocation2 + $0x10] sm:$0xff] %vm197, 0.0
        %201 = vst.msk [vmem:[#allocation2 + $0x18] sm:$0xff] %vm197, 0.0
        %202 = vst.msk [vmem:[#allocation2 + $0x20] sm:$0xff] %vm197, 0.0
        %203 = vst.msk [vmem:[#allocation2 + $0x28] sm:$0xff] %vm197, 0.0
        %204 = vst.msk [vmem:[#allocation2 + $0x30] sm:$0xff] %vm197, 0.0
        %205 = vst.msk [vmem:[#allocation2 + $0x38] sm:$0xff] %vm197, 0.0
      $region32: #{smooth_downsample.1} parent=27 // pred_fallthru
        _
      %v206 = vld [vmem:[#allocation2] sm:$0xff]
      %v207 = vld [vmem:[#allocation2 + $0x8] sm:$0xff]
      %v208 = vld [vmem:[#allocation2 + $0x10] sm:$0xff]
      %v209 = vld [vmem:[#allocation2 + $0x18] sm:$0xff]
      %v210 = vld [vmem:[#allocation2 + $0x20] sm:$0xff]
      %v211 = vld [vmem:[#allocation2 + $0x28] sm:$0xff]
      %v212 = vld [vmem:[#allocation2 + $0x30] sm:$0xff]
      %v213 = vld [vmem:[#allocation2 + $0x38] sm:$0xff]
      %v214 = vld [vmem:[%s178] sm:$0xf]
      %v215 = vld [vmem:[%s178 + $0x4] sm:$0xf]
      %v216 = vld [vmem:[%s178 + $0x8] sm:$0xf]
      %v217 = vld [vmem:[%s178 + $0xc] sm:$0xf]
      %v218 = vld [vmem:[%s178 + $0x10] sm:$0xf]
      %v219 = vld [vmem:[%s178 + $0x14] sm:$0xf]
      %v220 = vld [vmem:[%s178 + $0x18] sm:$0xf]
      %v221 = vld [vmem:[%s178 + $0x1c] sm:$0xf]
      %v222 = vld [vmem:[%s184] sm:$0xf]
      %v223 = vld [vmem:[%s184 + $0x4] sm:$0xf]
      %v224 = vld [vmem:[%s184 + $0x8] sm:$0xf]
      %v225 = vld [vmem:[%s184 + $0xc] sm:$0xf]
      %v226 = vld [vmem:[%s184 + $0x10] sm:$0xf]
      %v227 = vld [vmem:[%s184 + $0x14] sm:$0xf]
      %v228 = vld [vmem:[%s184 + $0x18] sm:$0xf]
      %v229 = vld [vmem:[%s184 + $0x1c] sm:$0xf]
      %v238 = vunpack.c.l.b16 %v214
      %v239 = vunpack.c.l.b16 %v215
      %v240 = vunpack.c.l.b16 %v216
      %v241 = vunpack.c.l.b16 %v217
      %v242 = vunpack.c.l.b16 %v218
      %v243 = vunpack.c.l.b16 %v219
      %v244 = vunpack.c.l.b16 %v220
      %v245 = vunpack.c.l.b16 %v221
      %v246 = vpack.c.b16 %v239, %v238
      %v247 = vpack.c.b16 %v241, %v240
      %v248 = vpack.c.b16 %v243, %v242
      %v249 = vpack.c.b16 %v245, %v244
      %v258 = vunpack.c.l.b16 %v222
      %v259 = vunpack.c.l.b16 %v223
      %v260 = vunpack.c.l.b16 %v224
      %v261 = vunpack.c.l.b16 %v225
      %v262 = vunpack.c.l.b16 %v226
      %v263 = vunpack.c.l.b16 %v227
      %v264 = vunpack.c.l.b16 %v228
      %v265 = vunpack.c.l.b16 %v229
      %v266 = vpack.c.b16 %v259, %v258
      %v267 = vpack.c.b16 %v261, %v260
      %v268 = vpack.c.b16 %v263, %v262
      %v269 = vpack.c.b16 %v265, %v264
      %vm274 = vcmask 523264
      %v276 = vsel %vm274, %v246, 0
      %v279 = vsel %vm274, %v247, 0
      %v282 = vsel %vm274, %v248, 0
      %v285 = vsel %vm274, %v249, 0
      %287 = vmatpush.bf16.msra.mxu0 0
      %288 = vmatpush.bf16.msra.mxu0 0
      %289 = vmatpush.bf16.msra.mxu0 0
      %290 = vmatpush.bf16.msra.mxu0 0
      %291 = vmatpush.bf16.msra.mxu0 %v269
      %292 = vmatpush.bf16.msra.mxu0 %v268
      %293 = vmatpush.bf16.msra.mxu0 %v267
      %294 = vmatpush.bf16.msra.mxu0 %v266
      %295 = vmatmul.bf16.gmra.mxu0 %v276
      %v296 = vpop.f32.mrf.mxu0
      %v297 = vadd.f32 0.0, %v296
      %v298 = vpop.f32.mrf.mxu0
      %v299 = vadd.f32 0.0, %v298
      %300 = vmatmul.bf16.gmra.mxu0 %v279
      %v301 = vpop.f32.mrf.mxu0
      %v302 = vadd.f32 0.0, %v301
      %v303 = vpop.f32.mrf.mxu0
      %v304 = vadd.f32 0.0, %v303
      %305 = vmatmul.bf16.gmra.mxu0 %v282
      %v306 = vpop.f32.mrf.mxu0
      %v307 = vadd.f32 0.0, %v306
      %v308 = vpop.f32.mrf.mxu0
      %v309 = vadd.f32 0.0, %v308
      %310 = vmatmul.bf16.gmra.mxu0 %v285
      %v311 = vpop.f32.mrf.mxu0
      %v312 = vadd.f32 0.0, %v311
      %v313 = vpop.f32.mrf.mxu0
      %v314 = vadd.f32 0.0, %v313
      %315 = vdwg.mxu0
      %v316 = vadd.f32 %v206, %v297
      %v317 = vadd.f32 %v207, %v299
      %v318 = vadd.f32 %v208, %v302
      %v319 = vadd.f32 %v209, %v304
      %v320 = vadd.f32 %v210, %v307
      %v321 = vadd.f32 %v211, %v309
      %v322 = vadd.f32 %v212, %v312
      %v323 = vadd.f32 %v213, %v314
      %vm324 = vcmask 64512
      %325 = vst.msk [vmem:[#allocation2] sm:$0xff] %vm324, %v316
      %326 = vst.msk [vmem:[#allocation2 + $0x8] sm:$0xff] %vm324, %v317
      %327 = vst.msk [vmem:[#allocation2 + $0x10] sm:$0xff] %vm324, %v318
      %328 = vst.msk [vmem:[#allocation2 + $0x18] sm:$0xff] %vm324, %v319
      %329 = vst.msk [vmem:[#allocation2 + $0x20] sm:$0xff] %vm324, %v320
      %330 = vst.msk [vmem:[#allocation2 + $0x28] sm:$0xff] %vm324, %v321
      %331 = vst.msk [vmem:[#allocation2 + $0x30] sm:$0xff] %vm324, %v322
      %332 = vst.msk [vmem:[#allocation2 + $0x38] sm:$0xff] %vm324, %v323
      // Predicated region
      $region33: #{smooth_downsample.1} parent=27 // pred_check
        %p333 = pneg %p193
      $region34: #{smooth_downsample.1} parent=27 // pred_check_branch
        %335 = sbr.rel (%p333) target = $region36
      $region35: #{smooth_downsample.1} parent=27 // pred_region
        %v336 = vld [vmem:[#allocation2] sm:$0xff]
        %v337 = vld [vmem:[#allocation2 + $0x8] sm:$0xff]
        %v338 = vld [vmem:[#allocation2 + $0x10] sm:$0xff]
        %v339 = vld [vmem:[#allocation2 + $0x18] sm:$0xff]
        %v340 = vld [vmem:[#allocation2 + $0x20] sm:$0xff]
        %v341 = vld [vmem:[#allocation2 + $0x28] sm:$0xff]
        %v342 = vld [vmem:[#allocation2 + $0x30] sm:$0xff]
        %v343 = vld [vmem:[#allocation2 + $0x38] sm:$0xff]
        %344 = vst.msk [vmem:[%s190] sm:$0xff] %vm324, %v336
        %345 = vst.msk [vmem:[%s190 + $0x8] sm:$0xff] %vm324, %v337
        %346 = vst.msk [vmem:[%s190 + $0x10] sm:$0xff] %vm324, %v338
        %347 = vst.msk [vmem:[%s190 + $0x18] sm:$0xff] %vm324, %v339
        %348 = vst.msk [vmem:[%s190 + $0x20] sm:$0xff] %vm324, %v340
        %349 = vst.msk [vmem:[%s190 + $0x28] sm:$0xff] %vm324, %v341
        %350 = vst.msk [vmem:[%s190 + $0x30] sm:$0xff] %vm324, %v342
        %351 = vst.msk [vmem:[%s190 + $0x38] sm:$0xff] %vm324, %v343
      $region36: #{smooth_downsample.1} parent=27 // pred_fallthru
        _
      %s352 = smul.u32 8, %s17
      %p353 = scmp.lt.s32.totalorder %s352, 15
      %s354 = scalar_select %p353, %s352, 15
      %s355 = smul.addr %s354, 8
      %s356 = scalar_lea.vmem %s2, %s355
      // Predicated region
      $region37: #{smooth_downsample.1} parent=27 // pred_check
        %p357 = pneg %p97
      $region38: #{smooth_downsample.1} parent=27 // pred_check_branch
        %359 = sbr.rel (%p357) target = $region40
      $region39: #{smooth_downsample.1} parent=27 // pred_region
        %s360 = smul.u32 8, %s17
      $region40: #{smooth_downsample.1} parent=27 // pred_fallthru
        _
    $region28: #{smooth_downsample.1} parent=5 // pred_fallthru
      _
    %p361 = scmp.le.s32.totalorder 2, %s8
    // Predicated region
    $region41: #{smooth_downsample.1} parent=5 // pred_check
      %p362 = pneg %p361
    $region42: #{smooth_downsample.1} parent=5 // pred_check_branch
      %364 = sbr.rel (%p362) target = $region44
    $region43: #{smooth_downsample.1} parent=5 // pred_region
      %s365 = ssub.s32 %s8, 2
      // Predicated region
      $region45: #{smooth_downsample.1} parent=43 // pred_check
        %p366 = pneg %p103
      $region46: #{smooth_downsample.1} parent=43 // pred_check_branch
        %368 = sbr.rel (%p366) target = $region48
      $region47: #{smooth_downsample.1} parent=43 // pred_region
        %s369 = smul.u32 8, %s19
        %p370 = scmp.lt.s32.totalorder %s369, 15
        %s371 = scalar_select %p370, %s369, 15
        %s372 = smul.addr %s371, 8
        %s373 = scalar_lea.vmem %s2, %s372
      $region48: #{smooth_downsample.1} parent=43 // pred_fallthru
        _
    $region44: #{smooth_downsample.1} parent=5 // pred_fallthru
      _
  $region6: #{smooth_downsample.1} parent=0 // loop_footer
    %s12 = sadd.s32 1, %s8
  $region7: #{smooth_downsample.1} parent=0 // loop_footer_branch
    %7 = sbr.rel target = $region3
  $region8: #{smooth_downsample.1} parent=0 // loop_exit
    _

</llo_original>
